<compile_context>
chip_gen: v6e
topology: v6e:2x2x1
jax: 0.10.0
libtpu: 0.0.40
codegen_flags: <defaults>
</compile_context>

<pallas_src>
import functools

import numpy as np
import jax
import jax.numpy as jnp
from jax import lax
from jax.experimental import pallas as pl
from jax.experimental.pallas import tpu as pltpu


def _grounding_kernel(src_ref, dfm_ref, sum_ref, cnt_ref, min_ref,
                      *, eps, n_valid, rows_per_tile):
    """Two-phase streaming kernel over one batch.

    Grid: (B, 2, T).  Phase 0 accumulates the per-batch ground level into an
    SMEM scalar; phase 1 accumulates masked |src - dfm| sums (f32) and mask
    counts (int32) into lane-dense (1, 8, 128) resident output blocks.
    """
    phase = pl.program_id(1)
    t = pl.program_id(2)

    # Validity mask for this (1, R, 128) tile: global point index < n_valid.
    # Padded entries therefore never influence the min nor the eps-band mask,
    # regardless of the pad value.
    row_ids = lax.broadcasted_iota(jnp.int32, src_ref.shape, 1)
    lane_ids = lax.broadcasted_iota(jnp.int32, src_ref.shape, 2)
    idx = (t * rows_per_tile + row_ids) * 128 + lane_ids
    valid = idx < n_valid

    # ---- per-batch init (first iteration of this batch) ----
    @pl.when(jnp.logical_and(phase == 0, t == 0))
    def _():
        sum_ref[...] = jnp.zeros_like(sum_ref)
        cnt_ref[...] = jnp.zeros_like(cnt_ref)

    # ---- phase 0: running per-batch minimum of the source up-coordinate ----
    @pl.when(phase == 0)
    def _():
        s = jnp.where(valid, src_ref[...], jnp.inf)
        tile_min = jnp.min(s)               # cross-lane/sublane reduce -> XLU

        @pl.when(t == 0)
        def _():
            min_ref[0] = tile_min

        @pl.when(t > 0)
        def _():
            min_ref[0] = jnp.minimum(min_ref[0], tile_min)

    # ---- phase 1: masked |src - dfm| accumulation ----
    @pl.when(phase == 1)
    def _():
        s = src_ref[...]                    # (1, R, 128)
        d = dfm_ref[...]                    # (1, R, 128)
        gl = min_ref[0]                     # per-batch ground level (scalar)
        mask = jnp.logical_and(valid, jnp.abs(s - gl) < eps)
        diff = jnp.where(mask, jnp.abs(s - d), 0.0)

        # Collapse the tile onto a fixed (1, 8, 128) slab: split the sublane
        # axis into (R//8, 8) (layout-preserving) and sum over the outer axis
        # -> pure vreg adds, no cross-lane movement.
        r8 = rows_per_tile // 8
        sum_ref[...] += jnp.sum(diff.reshape(1, r8, 8, 128), axis=1)
        cnt_ref[...] += jnp.sum(mask.astype(jnp.int32).reshape(1, r8, 8, 128),
                                axis=1)


@functools.partial(jax.jit, static_argnames=("up_dim", "eps", "tile_rows"))
def grounding_loss(source, deformed, up_dim=1, eps=0.01, tile_rows=4096):
    """Pallas-backed GroundingLoss.forward (mean |src-dfm| over eps-band points)."""
    B, N, _ = source.shape

    # Channel slice (fused under jit with the pad / reshape below).
    src_up = source[:, :, up_dim].astype(jnp.float32)     # (B, N)
    dfm_up = deformed[:, :, up_dim].astype(jnp.float32)   # (B, N)

    # Sublane+lane dense layout: (B, N) -> (B, rows_pad, 128).
    rows = -(-N // 128)                                     # ceil(N / 128)
    R = max(8, min(int(tile_rows), -(-rows // 8) * 8))      # tile rows, mult of 8
    R = (R // 8) * 8
    rows_pad = -(-rows // R) * R
    n_pad = rows_pad * 128
    if n_pad != N:
        src_up = jnp.pad(src_up, ((0, 0), (0, n_pad - N)))
        dfm_up = jnp.pad(dfm_up, ((0, 0), (0, n_pad - N)))
    src_up = src_up.reshape(B, rows_pad, 128)
    dfm_up = dfm_up.reshape(B, rows_pad, 128)
    n_tiles = rows_pad // R

    kernel = functools.partial(_grounding_kernel, eps=float(eps),
                               n_valid=N, rows_per_tile=R)

    sums, cnts = pl.pallas_call(
        kernel,
        out_shape=(jax.ShapeDtypeStruct((B, 8, 128), jnp.float32),
                   jax.ShapeDtypeStruct((B, 8, 128), jnp.int32)),
        grid_spec=pltpu.PrefetchScalarGridSpec(
            num_scalar_prefetch=0,
            grid=(B, 2, n_tiles),
            in_specs=[
                # source up-coord: streamed in both phases.
                pl.BlockSpec((1, R, 128), lambda b, p, t: (b, t, 0)),
                # deformed up-coord: block index pinned at 0 during phase 0 so
                # its tiles are only streamed during phase 1.
                pl.BlockSpec((1, R, 128), lambda b, p, t: (b, t * p, 0)),
            ],
            out_specs=[
                # per-batch lane-dense partial sums / counts, resident in VMEM
                # across both phases, written back to HBM once per batch.
                pl.BlockSpec((1, 8, 128), lambda b, p, t: (b, 0, 0)),
                pl.BlockSpec((1, 8, 128), lambda b, p, t: (b, 0, 0)),
            ],
            scratch_shapes=[
                pltpu.SMEM((1,), jnp.float32),   # running min / ground level
            ],
        ),
        compiler_params=pltpu.CompilerParams(
            dimension_semantics=("parallel", "arbitrary", "arbitrary")),
    )(src_up, dfm_up)

    # torch.mean over the flattened masked_select == total sum / total count.
    total = jnp.sum(sums)
    count = jnp.sum(cnts)
    return total / count.astype(jnp.float32)


def reference_grounding_loss(source, deformed, up_dim=1, eps=0.01):
    """Pure-JAX reference mirroring the PyTorch forward."""
    s = source[:, :, up_dim]
    d = deformed[:, :, up_dim]
    gl = jnp.min(s, axis=1, keepdims=True)
    mask = jnp.abs(s - gl) < eps
    diff = jnp.abs(s - d)
    return jnp.sum(jnp.where(mask, diff, 0.0)) / jnp.sum(mask)


if __name__ == "__main__":
    key = jax.random.PRNGKey(0)
    B, N = 2, 300  # rows = ceil(300/128) = 3 -> tile (1, 8, 128), 1 tile/batch

    k1, k2, k3 = jax.random.split(key, 3)
    source = jax.random.normal(k1, (B, N, 3), dtype=jnp.float32)
    deformed = source + 0.1 * jax.random.normal(k2, (B, N, 3), dtype=jnp.float32)

    # Build a "ground plane": lift the up-coords off the floor, then place the
    # first 32 points per batch on a plane at -2 with sub-eps jitter so the
    # eps-band mask selects multiple points.
    up = jnp.clip(source[:, :, 1], -1.5, None)
    jitter = 0.005 * jax.random.uniform(k3, (B, 32), dtype=jnp.float32)
    up = up.at[:, :32].set(-2.0 + jitter)
    source = source.at[:, :, 1].set(up)

    loss = grounding_loss(source, deformed, up_dim=1, eps=0.01)
    loss = jax.block_until_ready(loss)

    ref = reference_grounding_loss(source, deformed, up_dim=1, eps=0.01)
    np.testing.assert_allclose(np.asarray(loss), np.asarray(ref),
                               rtol=1e-5, atol=1e-6)
    print("KERNEL_OK")
</pallas_src>

<mosaic_0001>
module attributes {stable_mosaic.version = 11 : i64} {
  func.func @_grounding_kernel(%arg0: i32, %arg1: i32, %arg2: i32, %arg3: memref<1x8x128xf32, #tpu.memory_space<vmem>>, %arg4: memref<1x8x128xf32, #tpu.memory_space<vmem>>, %arg5: memref<1x8x128xf32, #tpu.memory_space<vmem>>, %arg6: memref<1x8x128xi32, #tpu.memory_space<vmem>>, %arg7: memref<1xf32, #tpu.memory_space<smem>>) attributes {dimension_semantics = [#tpu.dimension_semantics<parallel>, #tpu.dimension_semantics<arbitrary>, #tpu.dimension_semantics<arbitrary>], iteration_bounds = array<i64: 2, 2, 1>, scalar_prefetch = 0 : i64, scratch_operands = 1 : i64, tpu.core_type = #tpu.core_type<tc>, window_params = [{transform_indices = @transform_0, window_bounds = array<i64: 1, 8, 128>}, {transform_indices = @transform_1, window_bounds = array<i64: 1, 8, 128>}, {transform_indices = @transform_2, window_bounds = array<i64: 1, 8, 128>}, {transform_indices = @transform_3, window_bounds = array<i64: 1, 8, 128>}]} {
    %0 = tpu.iota {dimensions = array<i32: 1>} : vector<1x8x128xi32>
    %1 = tpu.iota {dimensions = array<i32: 2>} : vector<1x8x128xi32>
    %c8_i32 = arith.constant 8 : i32
    %2 = arith.muli %arg2, %c8_i32 : i32
    %3 = vector.broadcast %2 : i32 to vector<1x8x128xi32>
    %4 = arith.addi %3, %0 : vector<1x8x128xi32>
    %c128_i32 = arith.constant 128 : i32
    %5 = vector.broadcast %c128_i32 : i32 to vector<1x8x128xi32>
    %6 = arith.muli %4, %5 : vector<1x8x128xi32>
    %7 = arith.addi %6, %1 : vector<1x8x128xi32>
    %c300_i32 = arith.constant 300 : i32
    %8 = vector.broadcast %c300_i32 : i32 to vector<1x8x128xi32>
    %9 = arith.cmpi slt, %7, %8 : vector<1x8x128xi32>
    %c0_i32 = arith.constant 0 : i32
    %10 = arith.cmpi eq, %arg1, %c0_i32 : i32
    %c0_i32_0 = arith.constant 0 : i32
    %11 = arith.cmpi eq, %arg2, %c0_i32_0 : i32
    %12 = arith.andi %10, %11 : i1
    %13 = arith.extui %12 : i1 to i32
    %c0_i32_1 = arith.constant 0 : i32
    %14 = arith.cmpi ne, %13, %c0_i32_1 : i32
    scf.if %14 {
      %cst = arith.constant 0.000000e+00 : f32
      %21 = vector.broadcast %cst : f32 to vector<1x8x128xf32>
      %c0 = arith.constant 0 : index
      %c0_5 = arith.constant 0 : index
      %c0_6 = arith.constant 0 : index
      %22 = vector.load %arg5[%c0, %c0_5, %c0_6] : memref<1x8x128xf32, #tpu.memory_space<vmem>>, vector<1x8x128xf32>
      tpu.vector_store %arg5[%c0, %c0_5, %c0_6], %21 {strides = array<i32>} : memref<1x8x128xf32, #tpu.memory_space<vmem>>, vector<1x8x128xf32>,
      %c0_i32_7 = arith.constant 0 : i32
      %23 = vector.broadcast %c0_i32_7 : i32 to vector<1x8x128xi32>
      %c0_8 = arith.constant 0 : index
      %c0_9 = arith.constant 0 : index
      %c0_10 = arith.constant 0 : index
      %24 = vector.load %arg6[%c0_8, %c0_9, %c0_10] : memref<1x8x128xi32, #tpu.memory_space<vmem>>, vector<1x8x128xi32>
      tpu.vector_store %arg6[%c0_8, %c0_9, %c0_10], %23 {strides = array<i32>} : memref<1x8x128xi32, #tpu.memory_space<vmem>>, vector<1x8x128xi32>,
    } else {
    }
    %c0_i32_2 = arith.constant 0 : i32
    %15 = arith.cmpi eq, %arg1, %c0_i32_2 : i32
    %16 = arith.extui %15 : i1 to i32
    %c0_i32_3 = arith.constant 0 : i32
    %17 = arith.cmpi ne, %16, %c0_i32_3 : i32
    scf.if %17 {
      %c0 = arith.constant 0 : index
      %c0_5 = arith.constant 0 : index
      %c0_6 = arith.constant 0 : index
      %21 = vector.load %arg3[%c0, %c0_5, %c0_6] : memref<1x8x128xf32, #tpu.memory_space<vmem>>, vector<1x8x128xf32>
      %cst = arith.constant 0x7F800000 : f32
      %22 = vector.broadcast %cst : f32 to vector<1x8x128xf32>
      %23 = arith.select %9, %21, %22 : vector<1x8x128xi1>, vector<1x8x128xf32>
      %24 = vector.shape_cast %23 : vector<1x8x128xf32> to vector<1x1x8x128xf32>
      %cst_7 = arith.constant dense<0x7F800000> : vector<1xf32>
      %25 = vector.multi_reduction <minimumf>, %24, %cst_7 [1, 2, 3] : vector<1x1x8x128xf32> to vector<1xf32>
      %26 = vector.shape_cast %25 : vector<1xf32> to vector<1x1x1x1xf32>
      %27 = vector.extract %26[0, 0, 0, 0] : f32 from vector<1x1x1x1xf32>
      %c0_i32_8 = arith.constant 0 : i32
      %28 = arith.cmpi eq, %arg2, %c0_i32_8 : i32
      %29 = arith.extui %28 : i1 to i32
      %c0_i32_9 = arith.constant 0 : i32
      %30 = arith.cmpi ne, %29, %c0_i32_9 : i32
      scf.if %30 {
        %c0_12 = arith.constant 0 : index
        %34 = memref.load %arg7[%c0_12] : memref<1xf32, #tpu.memory_space<smem>>
        memref.store %27, %arg7[%c0_12] : memref<1xf32, #tpu.memory_space<smem>>
      } else {
      }
      %c0_i32_10 = arith.constant 0 : i32
      %31 = arith.cmpi sgt, %arg2, %c0_i32_10 : i32
      %32 = arith.extui %31 : i1 to i32
      %c0_i32_11 = arith.constant 0 : i32
      %33 = arith.cmpi ne, %32, %c0_i32_11 : i32
      scf.if %33 {
        %c0_12 = arith.constant 0 : index
        %34 = memref.load %arg7[%c0_12] : memref<1xf32, #tpu.memory_space<smem>>
        %35 = arith.minimumf %34, %27 : f32
        %c0_13 = arith.constant 0 : index
        %36 = memref.load %arg7[%c0_13] : memref<1xf32, #tpu.memory_space<smem>>
        memref.store %35, %arg7[%c0_13] : memref<1xf32, #tpu.memory_space<smem>>
      } else {
      }
    } else {
    }
    %c1_i32 = arith.constant 1 : i32
    %18 = arith.cmpi eq, %arg1, %c1_i32 : i32
    %19 = arith.extui %18 : i1 to i32
    %c0_i32_4 = arith.constant 0 : i32
    %20 = arith.cmpi ne, %19, %c0_i32_4 : i32
    scf.if %20 {
      %c0 = arith.constant 0 : index
      %c0_5 = arith.constant 0 : index
      %c0_6 = arith.constant 0 : index
      %21 = vector.load %arg3[%c0, %c0_5, %c0_6] : memref<1x8x128xf32, #tpu.memory_space<vmem>>, vector<1x8x128xf32>
      %c0_7 = arith.constant 0 : index
      %c0_8 = arith.constant 0 : index
      %c0_9 = arith.constant 0 : index
      %22 = vector.load %arg4[%c0_7, %c0_8, %c0_9] : memref<1x8x128xf32, #tpu.memory_space<vmem>>, vector<1x8x128xf32>
      %c0_10 = arith.constant 0 : index
      %23 = memref.load %arg7[%c0_10] : memref<1xf32, #tpu.memory_space<smem>>
      %24 = vector.broadcast %23 : f32 to vector<1x8x128xf32>
      %25 = arith.subf %21, %24 : vector<1x8x128xf32>
      %26 = math.absf %25 : vector<1x8x128xf32>
      %cst = arith.constant 0.00999999977 : f32
      %27 = vector.broadcast %cst : f32 to vector<1x8x128xf32>
      %28 = arith.cmpf olt, %26, %27 : vector<1x8x128xf32>
      %29 = arith.andi %9, %28 : vector<1x8x128xi1>
      %30 = arith.subf %21, %22 : vector<1x8x128xf32>
      %31 = math.absf %30 : vector<1x8x128xf32>
      %cst_11 = arith.constant 0.000000e+00 : f32
      %32 = vector.broadcast %cst_11 : f32 to vector<1x8x128xf32>
      %33 = arith.select %29, %31, %32 : vector<1x8x128xi1>, vector<1x8x128xf32>
      %c0_12 = arith.constant 0 : index
      %c0_13 = arith.constant 0 : index
      %c0_14 = arith.constant 0 : index
      %34 = vector.load %arg5[%c0_12, %c0_13, %c0_14] : memref<1x8x128xf32, #tpu.memory_space<vmem>>, vector<1x8x128xf32>
      %35 = vector.shape_cast %33 : vector<1x8x128xf32> to vector<1x1x8x128xf32>
      %cst_15 = arith.constant dense<0.000000e+00> : vector<1x8x128xf32>
      %36 = vector.multi_reduction <add>, %35, %cst_15 [1] : vector<1x1x8x128xf32> to vector<1x8x128xf32>
      %37 = arith.addf %34, %36 : vector<1x8x128xf32>
      %c0_16 = arith.constant 0 : index
      %c0_17 = arith.constant 0 : index
      %c0_18 = arith.constant 0 : index
      %38 = vector.load %arg5[%c0_16, %c0_17, %c0_18] : memref<1x8x128xf32, #tpu.memory_space<vmem>>, vector<1x8x128xf32>
      tpu.vector_store %arg5[%c0_16, %c0_17, %c0_18], %37 {strides = array<i32>} : memref<1x8x128xf32, #tpu.memory_space<vmem>>, vector<1x8x128xf32>,
      %c0_19 = arith.constant 0 : index
      %c0_20 = arith.constant 0 : index
      %c0_21 = arith.constant 0 : index
      %39 = vector.load %arg6[%c0_19, %c0_20, %c0_21] : memref<1x8x128xi32, #tpu.memory_space<vmem>>, vector<1x8x128xi32>
      %40 = arith.extui %29 : vector<1x8x128xi1> to vector<1x8x128xi32>
      %41 = vector.shape_cast %40 : vector<1x8x128xi32> to vector<1x1x8x128xi32>
      %cst_22 = arith.constant dense<0> : vector<1x8x128xi32>
      %42 = vector.multi_reduction <add>, %41, %cst_22 [1] : vector<1x1x8x128xi32> to vector<1x8x128xi32>
      %43 = arith.addi %39, %42 : vector<1x8x128xi32>
      %c0_23 = arith.constant 0 : index
      %c0_24 = arith.constant 0 : index
      %c0_25 = arith.constant 0 : index
      %44 = vector.load %arg6[%c0_23, %c0_24, %c0_25] : memref<1x8x128xi32, #tpu.memory_space<vmem>>, vector<1x8x128xi32>
      tpu.vector_store %arg6[%c0_23, %c0_24, %c0_25], %43 {strides = array<i32>} : memref<1x8x128xi32, #tpu.memory_space<vmem>>, vector<1x8x128xi32>,
    } else {
    }
    return
  }
  func.func @transform_0(%arg0: i32, %arg1: i32, %arg2: i32) -> (i32, i32, i32) {
    %c0_i32 = arith.constant 0 : i32
    %c0_i32_0 = arith.constant 0 : i32
    return %arg0, %arg2, %c0_i32 : i32, i32, i32
  }
  func.func @transform_1(%arg0: i32, %arg1: i32, %arg2: i32) -> (i32, i32, i32) {
    %0 = arith.muli %arg2, %arg1 : i32
    %c0_i32 = arith.constant 0 : i32
    %c0_i32_0 = arith.constant 0 : i32
    return %arg0, %0, %c0_i32 : i32, i32, i32
  }
  func.func @transform_2(%arg0: i32, %arg1: i32, %arg2: i32) -> (i32, i32, i32) {
    %c0_i32 = arith.constant 0 : i32
    %c0_i32_0 = arith.constant 0 : i32
    %c0_i32_1 = arith.constant 0 : i32
    return %arg0, %c0_i32, %c0_i32_0 : i32, i32, i32
  }
  func.func @transform_3(%arg0: i32, %arg1: i32, %arg2: i32) -> (i32, i32, i32) {
    %c0_i32 = arith.constant 0 : i32
    %c0_i32_0 = arith.constant 0 : i32
    %c0_i32_1 = arith.constant 0 : i32
    return %arg0, %c0_i32, %c0_i32_0 : i32, i32, i32
  }
}

</mosaic_0001>

<llo_original>
// kernel: grounding_loss.1
$region0: #{grounding_loss.1}
  #allocation0 [shape = 'u32[]', space=smem, size = 0x4, offset = 0x4, fixed_abs, tag = 'smem constant byte address 0x4 - core index']
  #allocation1 [shape = 'u32[144,128]{1,0:T(1,128)}', space=vmem, size = 0x12000, scoped, tag = 'internal scratch']
  #allocation2 [shape = 'f32[1]{0:T(128)}', space=smem, size = 0x200, scoped, tag = 'scratch operand']
  %s0 = inlined_call_operand.vmem [shape: f32[2,8,128], index: 0, kind: input, shape index: {}]
  %s1 = inlined_call_operand.vmem [shape: f32[2,8,128], index: 1, kind: input, shape index: {}]
  %s2 = inlined_call_operand.vmem [shape: f32[2,8,128], index: 2, kind: output, shape index: {0}]
  %s3 = inlined_call_operand.vmem [shape: s32[2,8,128], index: 3, kind: output, shape index: {1}]
  %4 = xla_tuple %s2, %s3
  %s5 = sld [smem:[#allocation0]]
  $region69: #{grounding_loss.1} parent=0
    _
  %s7 = ssub.s32 1, %s5
  %s8 = scalar_select 0, %s7, %s5
  loop: start=0, step=1, limit=6
  $region2: #{grounding_loss.1} parent=0 // loop_pre_header
    _
  $region3: #{grounding_loss.1} parent=0 // loop_header
    %s10 = sphi 0, %s14
    %p11 = scmp.ge.s32.totalorder %s10, 6
    %s17 = sphi 0, %s36
    %s18 = sphi 0, %s32
    %s19 = sphi 0, %s28
    %s20 = sphi 0, %s17
    %s21 = sphi 0, %s18
    %s22 = sphi 0, %s19
    %s23 = sphi 0, %s20
    %s24 = sphi 0, %s21
    %s25 = sphi 0, %s22
    %s41 = sphi 0, %s43
    %s44 = sphi 0, %s41
    %s45 = sphi 0, %s44
    %s61 = sphi 0, %s45
    %s71 = sphi 0, %s73
    %s74 = sphi 0, %s71
    %s75 = sphi 0, %s74
    %s91 = sphi 0, %s75
    %s97 = sphi 0, %s99
    %s100 = sphi 0, %s97
    %s101 = sphi 0, %s100
    %s117 = sphi 0, %s101
    %s123 = sphi 0, %s125
    %s126 = sphi 0, %s123
    %s127 = sphi 0, %s126
    %s143 = sphi 0, %s127
  $region4: #{grounding_loss.1} parent=0 // loop_header_branch
    %13 = sbr.rel (%p11) target = $region8
  $region5: #{grounding_loss.1} parent=0 // loop_body
    %s15 = ssub.s32 %s10, 1
    %s16 = ssub.s32 %s10, 2
    %s26 = sadd.s32 1, %s19
    %p27 = scmp.ge.s32.totalorder %s26, 1
    %s28 = scalar_select %p27, 0, %s26
    %s29 = sadd.s32 1, %s18
    %s30 = scalar_select %p27, %s29, %s18
    %p31 = scmp.ge.s32.totalorder %s30, 2
    %s32 = scalar_select %p31, 0, %s30
    %s33 = sadd.s32 1, %s17
    %s34 = scalar_select %p31, %s33, %s17
    %p35 = scmp.ge.s32.totalorder %s34, 2
    %s36 = scalar_select %p35, 0, %s34
    %s37 = ssub.s32 %s17, %s36
    %s38 = ssub.s32 %s19, %s28
    %s39 = sor.u32 %s37, %s38
    %p40 = scmp.eq.s32.totalorder %s39, 0
    %s42 = sadd.s32 %s41, 1
    %s43 = scalar_select %p40, %s41, %s42
    %p46 = pneg %p40
    %p47 = scmp.eq.s32.totalorder %s10, 3
    %p48 = por %p46, %p47
    %p49 = scmp.ne.s32.totalorder %s41, %s44
    %p50 = scmp.eq.s32.totalorder %s10, 0
    %p51 = por %p49, %p50
    %p52 = scmp.ne.s32.totalorder %s41, %s44
    %p53 = scmp.eq.s32.totalorder %s15, 3
    %p54 = por %p52, %p53
    %p55 = scmp.ne.s32.totalorder %s44, %s45
    %p56 = scmp.eq.s32.totalorder %s15, 0
    %p57 = por %p55, %p56
    %p58 = scmp.ne.s32.totalorder %s44, %s45
    %p59 = scmp.eq.s32.totalorder %s16, 3
    %p60 = por %p58, %p59
    %p62 = scmp.ne.s32.totalorder %s45, %s61
    %p63 = scmp.eq.s32.totalorder %s16, 0
    %p64 = por %p62, %p63
    %s65 = smul.u32 %s19, %s18
    %s66 = smul.u32 %s28, %s32
    %s67 = ssub.s32 %s17, %s36
    %s68 = ssub.s32 %s65, %s66
    %s69 = sor.u32 %s67, %s68
    %p70 = scmp.eq.s32.totalorder %s69, 0
    %s72 = sadd.s32 %s71, 1
    %s73 = scalar_select %p70, %s71, %s72
    %p76 = pneg %p70
    %p77 = scmp.eq.s32.totalorder %s10, 3
    %p78 = por %p76, %p77
    %p79 = scmp.ne.s32.totalorder %s71, %s74
    %p80 = scmp.eq.s32.totalorder %s10, 0
    %p81 = por %p79, %p80
    %p82 = scmp.ne.s32.totalorder %s71, %s74
    %p83 = scmp.eq.s32.totalorder %s15, 3
    %p84 = por %p82, %p83
    %p85 = scmp.ne.s32.totalorder %s74, %s75
    %p86 = scmp.eq.s32.totalorder %s15, 0
    %p87 = por %p85, %p86
    %p88 = scmp.ne.s32.totalorder %s74, %s75
    %p89 = scmp.eq.s32.totalorder %s16, 3
    %p90 = por %p88, %p89
    %p92 = scmp.ne.s32.totalorder %s75, %s91
    %p93 = scmp.eq.s32.totalorder %s16, 0
    %p94 = por %p92, %p93
    %s95 = ssub.s32 %s17, %s36
    %p96 = scmp.eq.s32.totalorder %s95, 0
    %s98 = sadd.s32 %s97, 1
    %s99 = scalar_select %p96, %s97, %s98
    %p102 = pneg %p96
    %p103 = scmp.eq.s32.totalorder %s10, 3
    %p104 = por %p102, %p103
    %p105 = scmp.ne.s32.totalorder %s97, %s100
    %p106 = scmp.eq.s32.totalorder %s10, 0
    %p107 = por %p105, %p106
    %p108 = scmp.ne.s32.totalorder %s97, %s100
    %p109 = scmp.eq.s32.totalorder %s15, 3
    %p110 = por %p108, %p109
    %p111 = scmp.ne.s32.totalorder %s100, %s101
    %p112 = scmp.eq.s32.totalorder %s15, 0
    %p113 = por %p111, %p112
    %p114 = scmp.ne.s32.totalorder %s100, %s101
    %p115 = scmp.eq.s32.totalorder %s16, 3
    %p116 = por %p114, %p115
    %p118 = scmp.ne.s32.totalorder %s101, %s117
    %p119 = scmp.eq.s32.totalorder %s16, 0
    %p120 = por %p118, %p119
    %s121 = ssub.s32 %s17, %s36
    %p122 = scmp.eq.s32.totalorder %s121, 0
    %s124 = sadd.s32 %s123, 1
    %s125 = scalar_select %p122, %s123, %s124
    %p128 = pneg %p122
    %p129 = scmp.eq.s32.totalorder %s10, 3
    %p130 = por %p128, %p129
    %p131 = scmp.ne.s32.totalorder %s123, %s126
    %p132 = scmp.eq.s32.totalorder %s10, 0
    %p133 = por %p131, %p132
    %p134 = scmp.ne.s32.totalorder %s123, %s126
    %p135 = scmp.eq.s32.totalorder %s15, 3
    %p136 = por %p134, %p135
    %p137 = scmp.ne.s32.totalorder %s126, %s127
    %p138 = scmp.eq.s32.totalorder %s15, 0
    %p139 = por %p137, %p138
    %p140 = scmp.ne.s32.totalorder %s126, %s127
    %p141 = scmp.eq.s32.totalorder %s16, 3
    %p142 = por %p140, %p141
    %p144 = scmp.ne.s32.totalorder %s127, %s143
    %p145 = scmp.eq.s32.totalorder %s16, 0
    %p146 = por %p144, %p145
    %p147 = scmp.le.s32.totalorder 1, %s10
    %p148 = scmp.lt.s32.totalorder %s10, 5
    %p149 = pnand %p147, %p148
    %p150 = pneg %p149
    // Predicated region
    $region9: #{grounding_loss.1} parent=5 // pred_check
      _
    $region10: #{grounding_loss.1} parent=5 // pred_check_branch
      %152 = sbr.rel (%p149) target = $region12
    $region11: #{grounding_loss.1} parent=5 // pred_region
      %s153 = ssub.s32 %s10, 1
    $region12: #{grounding_loss.1} parent=5 // pred_fallthru
      _
    %p154 = scmp.lt.s32.totalorder %s10, 4
    // Predicated region
    $region13: #{grounding_loss.1} parent=5 // pred_check
      %p155 = pneg %p154
    $region14: #{grounding_loss.1} parent=5 // pred_check_branch
      %157 = sbr.rel (%p155) target = $region16
    $region15: #{grounding_loss.1} parent=5 // pred_region
      // Predicated region
      $region17: #{grounding_loss.1} parent=15 // pred_check
        %p158 = pneg %p51
      $region18: #{grounding_loss.1} parent=15 // pred_check_branch
        %160 = sbr.rel (%p158) target = $region20
      $region19: #{grounding_loss.1} parent=15 // pred_region
        %p161 = scmp.lt.s32.totalorder %s17, 1
        %s162 = scalar_select %p161, %s17, 1
        %p163 = scmp.lt.s32.totalorder %s19, 0
        %s164 = scalar_select %p163, %s19, 0
        %s165 = sadd.s32 %s164, %s162
        %s166 = smul.addr %s165, 8
        %s167 = scalar_lea.vmem %s0, %s166
      $region20: #{grounding_loss.1} parent=15 // pred_fallthru
        _
      // Predicated region
      $region21: #{grounding_loss.1} parent=15 // pred_check
        %p168 = pneg %p81
      $region22: #{grounding_loss.1} parent=15 // pred_check_branch
        %170 = sbr.rel (%p168) target = $region24
      $region23: #{grounding_loss.1} parent=15 // pred_region
        %s171 = smul.u32 %s19, %s18
        %p172 = scmp.lt.s32.totalorder %s17, 1
        %s173 = scalar_select %p172, %s17, 1
        %p174 = scmp.lt.s32.totalorder %s171, 0
        %s175 = scalar_select %p174, %s171, 0
        %s176 = sadd.s32 %s175, %s173
        %s177 = smul.addr %s176, 8
        %s178 = scalar_lea.vmem %s1, %s177
        %s179 = smul.u32 %s19, %s18
      $region24: #{grounding_loss.1} parent=15 // pred_fallthru
        _
    $region16: #{grounding_loss.1} parent=5 // pred_fallthru
      _
    %p180 = scmp.le.s32.totalorder 1, %s10
    %p181 = scmp.lt.s32.totalorder %s10, 5
    %p182 = pnand %p180, %p181
    %p183 = pneg %p182
    // Predicated region
    $region25: #{grounding_loss.1} parent=5 // pred_check
      _
    $region26: #{grounding_loss.1} parent=5 // pred_check_branch
      %185 = sbr.rel (%p182) target = $region28
    $region27: #{grounding_loss.1} parent=5 // pred_region
      %s186 = ssub.s32 %s10, 1
      %p187 = scmp.lt.s32.totalorder %s20, 1
      %s188 = scalar_select %p187, %s20, 1
      %p189 = scmp.lt.s32.totalorder %s22, 0
      %s190 = scalar_select %p189, %s22, 0
      %s191 = sadd.s32 %s190, %s188
      %s192 = smul.addr %s191, 8
      %s193 = scalar_lea.vmem %s0, %s192
      %p194 = pneg %p57
      %p195 = pneg %p54
      %s196 = smul.u32 %s22, %s21
      %p197 = scmp.lt.s32.totalorder %s20, 1
      %s198 = scalar_select %p197, %s20, 1
      %p199 = scmp.lt.s32.totalorder %s196, 0
      %s200 = scalar_select %p199, %s196, 0
      %s201 = sadd.s32 %s200, %s198
      %s202 = smul.addr %s201, 8
      %s203 = scalar_lea.vmem %s1, %s202
      %p204 = pneg %p87
      %p205 = pneg %p84
      %p206 = pneg %p113
      %p207 = pneg %p110
      %p208 = scmp.lt.s32.totalorder %s20, 1
      %s209 = scalar_select %p208, %s20, 1
      %s210 = smul.addr %s209, 8
      %s211 = scalar_lea.vmem %s2, %s210
      %p212 = pneg %p139
      %p213 = pneg %p136
      %p214 = scmp.lt.s32.totalorder %s20, 1
      %s215 = scalar_select %p214, %s20, 1
      %s216 = smul.addr %s215, 8
      %s217 = scalar_lea.vmem %s3, %s216
      %p218 = scmp.lt.s32.totalorder %s20, 1
      %s219 = scalar_select %p218, %s20, 1
      %p220 = scmp.lt.s32.totalorder %s22, 0
      %s221 = scalar_select %p220, %s22, 0
      %s222 = sadd.s32 %s221, %s219
      %s223 = smul.addr %s222, 8
      %s224 = scalar_lea.vmem %s0, %s223
      %s225 = smul.u32 %s22, %s21
      %p226 = scmp.lt.s32.totalorder %s20, 1
      %s227 = scalar_select %p226, %s20, 1
      %p228 = scmp.lt.s32.totalorder %s225, 0
      %s229 = scalar_select %p228, %s225, 0
      %s230 = sadd.s32 %s229, %s227
      %s231 = smul.addr %s230, 8
      %s232 = scalar_lea.vmem %s1, %s231
      %s233 = smul.u32 %s22, %s21
      %p234 = scmp.lt.s32.totalorder %s20, 1
      %s235 = scalar_select %p234, %s20, 1
      %s236 = smul.addr %s235, 8
      %s237 = scalar_lea.vmem %s2, %s236
      %p238 = scmp.lt.s32.totalorder %s20, 1
      %s239 = scalar_select %p238, %s20, 1
      %s240 = smul.addr %s239, 8
      %s241 = scalar_lea.vmem %s3, %s240
      %v242 = vlaneseq
      %v243 = vshrl.u32 %v242, 7
      %v244 = vlaneseq
      %v245 = vand.u32 %v244, 127
      %s246 = smul.u32 %s22, 8
      %v247 = vstv %s246
      %v248 = vadd.s32 %v247, %v243
      %v249 = vmul.u32 %v248, 128
      %v250 = vadd.s32 %v249, %v245
      %vm251 = vcmp.lt.s32.totalorder %v250, 300
      %p252 = scmp.eq.s32.totalorder %s21, 0
      %p253 = scmp.eq.s32.totalorder %s22, 0
      %p254 = pnand %p252, %p253
      %p255 = pneg %p254
      // Predicated region
      $region29: #{grounding_loss.1} parent=27 // pred_check
        _
      $region30: #{grounding_loss.1} parent=27 // pred_check_branch
        %257 = sbr.rel (%p254) target = $region32
      $region31: #{grounding_loss.1} parent=27 // pred_region
        %258 = vst [vmem:[%s237] sm:$0xff] 0.0
        %259 = vst [vmem:[%s241] sm:$0xff] 0
      $region32: #{grounding_loss.1} parent=27 // pred_fallthru
        _
      // Predicated region
      $region33: #{grounding_loss.1} parent=27 // pred_check
        %p260 = pneg %p252
      $region34: #{grounding_loss.1} parent=27 // pred_check_branch
        %262 = sbr.rel (%p260) target = $region36
      $region35: #{grounding_loss.1} parent=27 // pred_region
        %v263 = vld [vmem:[%s224] sm:$0xff]
        %v264 = vsel %vm251, %v263, inf
        %265 = vmin.xlane.f32.xlu0 %v264
        %v266 = vpop.xlane.xlu0 %265
        %v267 = vrot.slane %v266, 4
        %v268 = vmin.f32 %v266, %v267
        %v269 = vrot.slane %v268, 2
        %v270 = vmin.f32 %v268, %v269
        %v271 = vrot.slane %v270, 1
        %v272 = vmin.f32 %v270, %v271
        %s273 = vtos %v272
        // Predicated region
        $region37: #{grounding_loss.1} parent=35 // pred_check
          %p274 = pneg %p253
        $region38: #{grounding_loss.1} parent=35 // pred_check_branch
          %276 = sbr.rel (%p274) target = $region40
        $region39: #{grounding_loss.1} parent=35 // pred_region
          %s277 = scalar_lea.smem [#allocation2], 0
          %278 = sst [smem:[%s277]] %s273
        $region40: #{grounding_loss.1} parent=35 // pred_fallthru
          _
        %p279 = scmp.gt.s32.totalorder %s22, 0
        // Predicated region
        $region41: #{grounding_loss.1} parent=35 // pred_check
          %p280 = pneg %p279
        $region42: #{grounding_loss.1} parent=35 // pred_check_branch
          %282 = sbr.rel (%p280) target = $region44
        $region43: #{grounding_loss.1} parent=35 // pred_region
          %s283 = sld [smem:[#allocation2]]
          %s284 = smin.f32 %s283, %s273
          %s285 = scalar_lea.smem [#allocation2], 0
          %286 = sst [smem:[%s285]] %s284
        $region44: #{grounding_loss.1} parent=35 // pred_fallthru
          _
      $region36: #{grounding_loss.1} parent=27 // pred_fallthru
        _
      %p287 = scmp.eq.s32.totalorder %s21, 1
      // Predicated region
      $region45: #{grounding_loss.1} parent=27 // pred_check
        %p288 = pneg %p287
      $region46: #{grounding_loss.1} parent=27 // pred_check_branch
        %290 = sbr.rel (%p288) target = $region48
      $region47: #{grounding_loss.1} parent=27 // pred_region
        %v291 = vld [vmem:[%s224] sm:$0xff]
        %v292 = vld [vmem:[%s232] sm:$0xff]
        %s293 = sld [smem:[#allocation2]]
        %v294 = vstv %s293
        %v295 = vsub.f32 %v291, %v294
        %v296 = vand.u32 2147483647, %v295
        %vm297 = vcmp.lt.f32.partialorder %v296, 0.01
        %vm298 = vmand %vm251, %vm297
        %v299 = vsub.f32 %v291, %v292
        %v300 = vand.u32 2147483647, %v299
        %v301 = vsel %vm298, %v300, 0.0
        %v302 = vld [vmem:[%s237] sm:$0xff]
        %v303 = vadd.f32 %v301, 0.0
        %v304 = vadd.f32 %v302, %v303
        %305 = vst [vmem:[%s237] sm:$0xff] %v304
        %v306 = vld [vmem:[%s241] sm:$0xff]
        %v307 = vsel %vm298, 1, 0
        %v308 = vadd.s32 %v306, %v307
        %309 = vst [vmem:[%s241] sm:$0xff] %v308
      $region48: #{grounding_loss.1} parent=27 // pred_fallthru
        _
      %p310 = scmp.lt.s32.totalorder %s20, 1
      %s311 = scalar_select %p310, %s20, 1
      %s312 = smul.addr %s311, 8
      %s313 = scalar_lea.vmem %s2, %s312
      %p314 = scmp.lt.s32.totalorder %s20, 1
      %s315 = scalar_select %p314, %s20, 1
      %s316 = smul.addr %s315, 8
      %s317 = scalar_lea.vmem %s3, %s316
      // Predicated region
      $region49: #{grounding_loss.1} parent=27 // pred_check
        %p318 = pneg %p110
      $region50: #{grounding_loss.1} parent=27 // pred_check_branch
        %320 = sbr.rel (%p318) target = $region52
      $region51: #{grounding_loss.1} parent=27 // pred_region
        _
      $region52: #{grounding_loss.1} parent=27 // pred_fallthru
        _
      // Predicated region
      $region53: #{grounding_loss.1} parent=27 // pred_check
        %p321 = pneg %p136
      $region54: #{grounding_loss.1} parent=27 // pred_check_branch
        %323 = sbr.rel (%p321) target = $region56
      $region55: #{grounding_loss.1} parent=27 // pred_region
        _
      $region56: #{grounding_loss.1} parent=27 // pred_fallthru
        _
    $region28: #{grounding_loss.1} parent=5 // pred_fallthru
      _
    %p324 = scmp.le.s32.totalorder 2, %s10
    // Predicated region
    $region57: #{grounding_loss.1} parent=5 // pred_check
      %p325 = pneg %p324
    $region58: #{grounding_loss.1} parent=5 // pred_check_branch
      %327 = sbr.rel (%p325) target = $region60
    $region59: #{grounding_loss.1} parent=5 // pred_region
      %s328 = ssub.s32 %s10, 2
      // Predicated region
      $region61: #{grounding_loss.1} parent=59 // pred_check
        %p329 = pneg %p116
      $region62: #{grounding_loss.1} parent=59 // pred_check_branch
        %331 = sbr.rel (%p329) target = $region64
      $region63: #{grounding_loss.1} parent=59 // pred_region
        %p332 = scmp.lt.s32.totalorder %s23, 1
        %s333 = scalar_select %p332, %s23, 1
        %s334 = smul.addr %s333, 8
        %s335 = scalar_lea.vmem %s2, %s334
      $region64: #{grounding_loss.1} parent=59 // pred_fallthru
        _
      // Predicated region
      $region65: #{grounding_loss.1} parent=59 // pred_check
        %p336 = pneg %p142
      $region66: #{grounding_loss.1} parent=59 // pred_check_branch
        %338 = sbr.rel (%p336) target = $region68
      $region67: #{grounding_loss.1} parent=59 // pred_region
        %p339 = scmp.lt.s32.totalorder %s23, 1
        %s340 = scalar_select %p339, %s23, 1
        %s341 = smul.addr %s340, 8
        %s342 = scalar_lea.vmem %s3, %s341
      $region68: #{grounding_loss.1} parent=59 // pred_fallthru
        _
    $region60: #{grounding_loss.1} parent=5 // pred_fallthru
      _
  $region6: #{grounding_loss.1} parent=0 // loop_footer
    %s14 = sadd.s32 1, %s10
  $region7: #{grounding_loss.1} parent=0 // loop_footer_branch
    %9 = sbr.rel target = $region3
  $region8: #{grounding_loss.1} parent=0 // loop_exit
    _

</llo_original>
